<compile_context>
chip_gen: v7x
topology: tpu7x:2x2x1
jax: 0.10.0
libtpu: 0.0.40
codegen_flags: <defaults>
</compile_context>

<pallas_src>
import math

import jax
import jax.numpy as jnp
import numpy as np
from jax.experimental import pallas as pl
from jax.experimental.pallas import tpu as pltpu

ES = 4               # element_size
C = 64               # channel
L = 4 * 4            # l_n * c_n == number of patches == dictionary atoms
E = ES * ES * C      # 1024 == embed dim
H = W = 16
SCALE = 1.0 / math.sqrt(E)


def _round_up(n, m):
    return ((n + m - 1) // m) * m


# ----------------------------- unfold / fold (glue, pure reshape) ----------
def _unfold4(x):
    # (B, C, 16, 16) -> (B, L, E); E index = c*16 + kh*4 + kw; L = pi*4 + pj
    B = x.shape[0]
    x = x.reshape(B, C, ES, ES, ES, ES)          # (B, c, pi, kh, pj, kw)
    x = x.transpose(0, 2, 4, 1, 3, 5)            # (B, pi, pj, c, kh, kw)
    return x.reshape(B, L, E)


def _fold4(a):
    # inverse of _unfold4: (B, L, E) -> (B, C, 16, 16)
    B = a.shape[0]
    a = a.reshape(B, ES, ES, C, ES, ES)          # (B, pi, pj, c, kh, kw)
    a = a.transpose(0, 3, 1, 4, 2, 5)            # (B, c, pi, kh, pj, kw)
    return a.reshape(B, C, H, W)


# ----------------------------- Pallas kernel --------------------------------
def _fused_attn_kernel(q_ref, a_ref, brow_ref, vo_ref, bo_ref, out_ref):
    # One grid step == one tile of TM query rows (rows from several batch
    # elements stacked; keys/values are shared, so stacking is exact).
    # TODO(synk): attention dropout (p=0.1) omitted -> eval-mode (deterministic) semantics.
    s = (jnp.dot(q_ref[...], a_ref[...], preferred_element_type=jnp.float32)
         + brow_ref[...])                                           # (TM, L)
    s = s - jnp.max(s, axis=-1, keepdims=True)
    p = jnp.exp(s)
    p = p * pl.reciprocal(jnp.sum(p, axis=-1, keepdims=True), approx=True)
    out_ref[...] = (jnp.dot(p, vo_ref[...], preferred_element_type=jnp.float32)
                    + bo_ref[...])                                  # (TM, E)


def dict_attention(q_flat, A, brow, Vo, bo):
    # q_flat: (N, E) with N = B * L.  Tile rows so the MXU M-dim is up to 128.
    N = q_flat.shape[0]
    TM = min(128, _round_up(N, 8))
    Npad = _round_up(N, TM)
    if Npad != N:
        q_flat = jnp.pad(q_flat, ((0, Npad - N), (0, 0)))

    out = pl.pallas_call(
        _fused_attn_kernel,
        out_shape=jax.ShapeDtypeStruct((Npad, E), jnp.float32),
        grid=(Npad // TM,),
        in_specs=[
            pl.BlockSpec((TM, E), lambda i: (i, 0)),   # query rows (per tile)
            pl.BlockSpec((E, L), lambda i: (0, 0)),    # A  = scale*Wq^T@kp^T
            pl.BlockSpec((1, L), lambda i: (0, 0)),    # brow
            pl.BlockSpec((L, E), lambda i: (0, 0)),    # Vo = vp@Wo^T
            pl.BlockSpec((1, E), lambda i: (0, 0)),    # bo
        ],
        out_specs=pl.BlockSpec((TM, E), lambda i: (i, 0)),
        compiler_params=pltpu.CompilerParams(
            dimension_semantics=("parallel",),         # v7x: shard tiles across TCs
            vmem_limit_bytes=32 * 1024 * 1024,         # tiny working set; fits v5e/v6e/v7x
        ),
    )(q_flat, A, brow, Vo, bo)
    return out[:N]


# ----------------------------- parameter-only precompute --------------------
def _precompute_constants(params):
    # Batch-invariant algebraic fold of the K/V projections and the score /
    # output projections (exact; dictionary and weights are parameters).
    d = params['dictionary']                               # (L, E)
    kp = d @ params['wk_t'] + params['bk']                 # (L, E)
    vp = d @ params['wv_t'] + params['bv']                 # (L, E)
    A = SCALE * (params['wq_t'] @ kp.T)                    # (E, L)
    brow = SCALE * (params['bq'] @ kp.T)                   # (1, L)
    Vo = vp @ params['wo_t']                               # (L, E)
    return A, brow, Vo


# ----------------------------- parameters -----------------------------------
def init_params(key):
    kd, kin, kout = jax.random.split(key, 3)
    # Dictionary: (l_n*c_n, 1, E) xavier_uniform -> stored squeezed as (L, E)
    bound_d = math.sqrt(6.0 / (1 * E + L * E))
    dictionary = jax.random.uniform(kd, (L, E), jnp.float32, -bound_d, bound_d)
    # MultiheadAttention in_proj_weight (3E, E), xavier_uniform; biases zero
    bound_in = math.sqrt(6.0 / (3 * E + E))
    in_proj_w = jax.random.uniform(kin, (3 * E, E), jnp.float32, -bound_in, bound_in)
    wq, wk, wv = jnp.split(in_proj_w, 3, axis=0)
    # out_proj: default Linear (kaiming-uniform-like) init, zero bias
    bound_out = 1.0 / math.sqrt(E)
    wo = jax.random.uniform(kout, (E, E), jnp.float32, -bound_out, bound_out)
    zeros = jnp.zeros((1, E), jnp.float32)
    return dict(dictionary=dictionary,
                wq_t=wq.T, wk_t=wk.T, wv_t=wv.T, wo_t=wo.T,
                bq=zeros, bk=zeros, bv=zeros, bo=zeros)
    # NOTE: self.norm and self.post_proj exist in __init__ but are never used
    # in forward(), so they are intentionally not materialized here.


# ----------------------------- forward ---------------------------------------
@jax.jit
def forward(x, params):
    B = x.shape[0]
    A, brow, Vo = _precompute_constants(params)            # parameter-only
    q = _unfold4(x).reshape(B * L, E)                      # (B*L, E)
    a = dict_attention(q, A, brow, Vo, params['bo'])       # (B*L, E)
    a = a.reshape(B, L, E)
    representation = _fold4(a) + x                         # (B, C, 16, 16)
    visible_D = _fold4(params['dictionary'][None])         # (1, C, 16, 16)
    return representation, visible_D


# ----------------------------- reference (pure JAX, for sanity check) --------
def _reference_attention(q, d, p):
    scale = 1.0 / math.sqrt(E)
    qp = (q @ p['wq_t'] + p['bq']) * scale
    kp = d @ p['wk_t'] + p['bk']
    vp = d @ p['wv_t'] + p['bv']
    s = jnp.einsum('ble,me->blm', qp, kp)
    attn = jax.nn.softmax(s, axis=-1)
    o = jnp.einsum('blm,me->ble', attn, vp)
    return o @ p['wo_t'] + p['bo']


if __name__ == "__main__":
    key = jax.random.PRNGKey(0)
    kparam, kx = jax.random.split(key)
    params = init_params(kparam)

    B = 2
    x = jax.random.normal(kx, (B, C, H, W), jnp.float32)

    rep, vis = forward(x, params)
    jax.block_until_ready((rep, vis))

    # sanity check against a pure-JAX (unfused) reference
    a_ref = _reference_attention(_unfold4(x), params['dictionary'], params)
    rep_ref = _fold4(a_ref) + x
    vis_ref = _fold4(params['dictionary'][None])
    np.testing.assert_allclose(np.asarray(rep), np.asarray(rep_ref),
                               rtol=3e-2, atol=2e-3)
    np.testing.assert_allclose(np.asarray(vis), np.asarray(vis_ref),
                               rtol=0, atol=0)
    assert rep.shape == (B, C, H, W) and vis.shape == (1, C, H, W)

    print("KERNEL_OK")
</pallas_src>

<mosaic_0001>
module attributes {stable_mosaic.version = 11 : i64} {
  func.func @_fused_attn_kernel(%arg0: i32, %arg1: memref<32x1024xf32, #tpu.memory_space<vmem>>, %arg2: memref<1024x16xf32, #tpu.memory_space<vmem>>, %arg3: memref<1x16xf32, #tpu.memory_space<vmem>>, %arg4: memref<16x1024xf32, #tpu.memory_space<vmem>>, %arg5: memref<1x1024xf32, #tpu.memory_space<vmem>>, %arg6: memref<32x1024xf32, #tpu.memory_space<vmem>>) attributes {dimension_semantics = [#tpu.dimension_semantics<parallel>], iteration_bounds = array<i64: 1>, scalar_prefetch = 0 : i64, scratch_operands = 0 : i64, tpu.core_type = #tpu.core_type<tc>, window_params = [{transform_indices = @transform_0, window_bounds = array<i64: 32, 1024>}, {pipeline_mode = #tpu.pipeline_mode<synchronous>, transform_indices = @transform_1, window_bounds = array<i64: 1024, 16>}, {pipeline_mode = #tpu.pipeline_mode<synchronous>, transform_indices = @transform_2, window_bounds = array<i64: 1, 16>}, {pipeline_mode = #tpu.pipeline_mode<synchronous>, transform_indices = @transform_3, window_bounds = array<i64: 16, 1024>}, {pipeline_mode = #tpu.pipeline_mode<synchronous>, transform_indices = @transform_4, window_bounds = array<i64: 1, 1024>}, {transform_indices = @transform_5, window_bounds = array<i64: 32, 1024>}]} {
    %c0 = arith.constant 0 : index
    %c0_0 = arith.constant 0 : index
    %0 = vector.load %arg1[%c0, %c0_0] : memref<32x1024xf32, #tpu.memory_space<vmem>>, vector<32x1024xf32>
    %c0_1 = arith.constant 0 : index
    %c0_2 = arith.constant 0 : index
    %1 = vector.load %arg2[%c0_1, %c0_2] : memref<1024x16xf32, #tpu.memory_space<vmem>>, vector<1024x16xf32>
    %cst = arith.constant dense<0.000000e+00> : vector<32x16xf32>
    %2 = tpu.matmul %0, %1, %cst {dimension_numbers = #tpu.dot_dimension_numbers<[1], [0], [0], [1], [0, 0, 1, 1], [], []>} : vector<32x1024xf32>, vector<1024x16xf32>, vector<32x16xf32> -> vector<32x16xf32>
    %c0_3 = arith.constant 0 : index
    %c0_4 = arith.constant 0 : index
    %3 = vector.load %arg3[%c0_3, %c0_4] : memref<1x16xf32, #tpu.memory_space<vmem>>, vector<1x16xf32>
    %4 = vector.broadcast %3 : vector<1x16xf32> to vector<32x16xf32>
    %5 = arith.addf %2, %4 : vector<32x16xf32>
    %cst_5 = arith.constant dense<0xFF800000> : vector<32xf32>
    %6 = vector.multi_reduction <maximumf>, %5, %cst_5 [1] : vector<32x16xf32> to vector<32xf32>
    %7 = vector.shape_cast %6 : vector<32xf32> to vector<32x1xf32>
    %8 = vector.broadcast %7 : vector<32x1xf32> to vector<32x16xf32>
    %9 = arith.subf %5, %8 : vector<32x16xf32>
    %10 = math.exp %9 : vector<32x16xf32>
    %cst_6 = arith.constant dense<0.000000e+00> : vector<32xf32>
    %11 = vector.multi_reduction <add>, %10, %cst_6 [1] : vector<32x16xf32> to vector<32xf32>
    %12 = vector.shape_cast %11 : vector<32xf32> to vector<32x1xf32>
    %13 = tpu.reciprocal %12 {approx = true} : vector<32x1xf32> -> vector<32x1xf32>
    %14 = vector.broadcast %13 : vector<32x1xf32> to vector<32x16xf32>
    %15 = arith.mulf %10, %14 : vector<32x16xf32>
    %c0_7 = arith.constant 0 : index
    %c0_8 = arith.constant 0 : index
    %16 = vector.load %arg4[%c0_7, %c0_8] : memref<16x1024xf32, #tpu.memory_space<vmem>>, vector<16x1024xf32>
    %cst_9 = arith.constant dense<0.000000e+00> : vector<32x1024xf32>
    %17 = tpu.matmul %15, %16, %cst_9 {dimension_numbers = #tpu.dot_dimension_numbers<[1], [0], [0], [1], [0, 0, 1, 1], [], []>} : vector<32x16xf32>, vector<16x1024xf32>, vector<32x1024xf32> -> vector<32x1024xf32>
    %c0_10 = arith.constant 0 : index
    %c0_11 = arith.constant 0 : index
    %18 = vector.load %arg5[%c0_10, %c0_11] : memref<1x1024xf32, #tpu.memory_space<vmem>>, vector<1x1024xf32>
    %19 = vector.broadcast %18 : vector<1x1024xf32> to vector<32x1024xf32>
    %20 = arith.addf %17, %19 : vector<32x1024xf32>
    %c0_12 = arith.constant 0 : index
    %c0_13 = arith.constant 0 : index
    %21 = vector.load %arg6[%c0_12, %c0_13] : memref<32x1024xf32, #tpu.memory_space<vmem>>, vector<32x1024xf32>
    tpu.vector_store %arg6[%c0_12, %c0_13], %20 {strides = array<i32>} : memref<32x1024xf32, #tpu.memory_space<vmem>>, vector<32x1024xf32>,
    return
  }
  func.func @transform_0(%arg0: i32) -> (i32, i32) {
    %c0_i32 = arith.constant 0 : i32
    %c0_i32_0 = arith.constant 0 : i32
    return %arg0, %c0_i32 : i32, i32
  }
  func.func @transform_1(%arg0: i32) -> (i32, i32) {
    %c0_i32 = arith.constant 0 : i32
    %c0_i32_0 = arith.constant 0 : i32
    %c0_i32_1 = arith.constant 0 : i32
    return %c0_i32, %c0_i32_0 : i32, i32
  }
  func.func @transform_2(%arg0: i32) -> (i32, i32) {
    %c0_i32 = arith.constant 0 : i32
    %c0_i32_0 = arith.constant 0 : i32
    %c0_i32_1 = arith.constant 0 : i32
    return %c0_i32, %c0_i32_0 : i32, i32
  }
  func.func @transform_3(%arg0: i32) -> (i32, i32) {
    %c0_i32 = arith.constant 0 : i32
    %c0_i32_0 = arith.constant 0 : i32
    %c0_i32_1 = arith.constant 0 : i32
    return %c0_i32, %c0_i32_0 : i32, i32
  }
  func.func @transform_4(%arg0: i32) -> (i32, i32) {
    %c0_i32 = arith.constant 0 : i32
    %c0_i32_0 = arith.constant 0 : i32
    %c0_i32_1 = arith.constant 0 : i32
    return %c0_i32, %c0_i32_0 : i32, i32
  }
  func.func @transform_5(%arg0: i32) -> (i32, i32) {
    %c0_i32 = arith.constant 0 : i32
    %c0_i32_0 = arith.constant 0 : i32
    return %arg0, %c0_i32 : i32, i32
  }
}

</mosaic_0001>

<llo_original>
// kernel: forward.1
$region0: #{forward.1}
  #allocation0 [shape = 'u32[]', space=smem, size = 0x4, offset = 0x4, fixed_abs, tag = 'smem constant byte address 0x4 - core index']
  #allocation1 [shape = 'u32[144,128]{1,0:T(1,128)}', space=vmem, size = 0x12000, scoped, tag = 'internal scratch']
  %s0 = inlined_call_operand.vmem [shape: f32[32,1024], index: 0, kind: input, shape index: {}]
  %s1 = inlined_call_operand.vmem [shape: f32[1024,16], index: 1, kind: input, shape index: {}]
  %s2 = inlined_call_operand.vmem [shape: f32[1,16], index: 2, kind: input, shape index: {}]
  %s3 = inlined_call_operand.vmem [shape: f32[16,1024], index: 3, kind: input, shape index: {}]
  %s4 = inlined_call_operand.vmem [shape: f32[1,1024], index: 4, kind: input, shape index: {}]
  %s5 = inlined_call_operand.vmem [shape: f32[32,1024], index: 5, kind: output, shape index: {}]
  %s6 = sld [smem:[#allocation0]]
  $region30: #{forward.1} parent=0
    _
  %s8 = ssub.s32 1, %s6
  %s9 = scalar_select 0, %s8, %s6
  // Predicated region
  $region2: #{forward.1} parent=0 // pred_check
    _
  $region3: #{forward.1} parent=0 // pred_check_branch
    %11 = sbr.rel (0) target = $region5
  $region4: #{forward.1} parent=0 // pred_region
    _
  $region5: #{forward.1} parent=0 // pred_fallthru
    _
  // Predicated region
  $region6: #{forward.1} parent=0 // pred_check
    _
  $region7: #{forward.1} parent=0 // pred_check_branch
    %13 = sbr.rel (0) target = $region9
  $region8: #{forward.1} parent=0 // pred_region
    _
  $region9: #{forward.1} parent=0 // pred_fallthru
    _
  // Predicated region
  $region10: #{forward.1} parent=0 // pred_check
    _
  $region11: #{forward.1} parent=0 // pred_check_branch
    %15 = sbr.rel (0) target = $region13
  $region12: #{forward.1} parent=0 // pred_region
    _
  $region13: #{forward.1} parent=0 // pred_fallthru
    _
  // Predicated region
  $region14: #{forward.1} parent=0 // pred_check
    _
  $region15: #{forward.1} parent=0 // pred_check_branch
    %17 = sbr.rel (0) target = $region17
  $region16: #{forward.1} parent=0 // pred_region
    _
  $region17: #{forward.1} parent=0 // pred_fallthru
    _
  // Predicated region
  $region18: #{forward.1} parent=0 // pred_check
    _
  $region19: #{forward.1} parent=0 // pred_check_branch
    %19 = sbr.rel (0) target = $region21
  $region20: #{forward.1} parent=0 // pred_region
    _
  $region21: #{forward.1} parent=0 // pred_fallthru
    _
  %v20 = vld [vmem:[%s0] sm:$0xff]
  %v21 = vld [vmem:[%s0 + $0x8] sm:$0xff]
  %v22 = vld [vmem:[%s0 + $0x10] sm:$0xff]
  %v23 = vld [vmem:[%s0 + $0x18] sm:$0xff]
  %v24 = vld [vmem:[%s0 + $0x20] sm:$0xff]
  %v25 = vld [vmem:[%s0 + $0x28] sm:$0xff]
  %v26 = vld [vmem:[%s0 + $0x30] sm:$0xff]
  %v27 = vld [vmem:[%s0 + $0x38] sm:$0xff]
  %v28 = vld [vmem:[%s0 + $0x40] sm:$0xff]
  %v29 = vld [vmem:[%s0 + $0x48] sm:$0xff]
  %v30 = vld [vmem:[%s0 + $0x50] sm:$0xff]
  %v31 = vld [vmem:[%s0 + $0x58] sm:$0xff]
  %v32 = vld [vmem:[%s0 + $0x60] sm:$0xff]
  %v33 = vld [vmem:[%s0 + $0x68] sm:$0xff]
  %v34 = vld [vmem:[%s0 + $0x70] sm:$0xff]
  %v35 = vld [vmem:[%s0 + $0x78] sm:$0xff]
  %v36 = vld [vmem:[%s0 + $0x80] sm:$0xff]
  %v37 = vld [vmem:[%s0 + $0x88] sm:$0xff]
  %v38 = vld [vmem:[%s0 + $0x90] sm:$0xff]
  %v39 = vld [vmem:[%s0 + $0x98] sm:$0xff]
  %v40 = vld [vmem:[%s0 + $0xa0] sm:$0xff]
  %v41 = vld [vmem:[%s0 + $0xa8] sm:$0xff]
  %v42 = vld [vmem:[%s0 + $0xb0] sm:$0xff]
  %v43 = vld [vmem:[%s0 + $0xb8] sm:$0xff]
  %v44 = vld [vmem:[%s0 + $0xc0] sm:$0xff]
  %v45 = vld [vmem:[%s0 + $0xc8] sm:$0xff]
  %v46 = vld [vmem:[%s0 + $0xd0] sm:$0xff]
  %v47 = vld [vmem:[%s0 + $0xd8] sm:$0xff]
  %v48 = vld [vmem:[%s0 + $0xe0] sm:$0xff]
  %v49 = vld [vmem:[%s0 + $0xe8] sm:$0xff]
  %v50 = vld [vmem:[%s0 + $0xf0] sm:$0xff]
  %v51 = vld [vmem:[%s0 + $0xf8] sm:$0xff]
  %v52 = vld [vmem:[%s1] sm:$0xff]
  %v53 = vld [vmem:[%s1 + $0x8] sm:$0xff]
  %v54 = vld [vmem:[%s1 + $0x10] sm:$0xff]
  %v55 = vld [vmem:[%s1 + $0x18] sm:$0xff]
  %v56 = vld [vmem:[%s1 + $0x20] sm:$0xff]
  %v57 = vld [vmem:[%s1 + $0x28] sm:$0xff]
  %v58 = vld [vmem:[%s1 + $0x30] sm:$0xff]
  %v59 = vld [vmem:[%s1 + $0x38] sm:$0xff]
  %v60 = vld [vmem:[%s1 + $0x40] sm:$0xff]
  %v61 = vld [vmem:[%s1 + $0x48] sm:$0xff]
  %v62 = vld [vmem:[%s1 + $0x50] sm:$0xff]
  %v63 = vld [vmem:[%s1 + $0x58] sm:$0xff]
  %v64 = vld [vmem:[%s1 + $0x60] sm:$0xff]
  %v65 = vld [vmem:[%s1 + $0x68] sm:$0xff]
  %v66 = vld [vmem:[%s1 + $0x70] sm:$0xff]
  %v67 = vld [vmem:[%s1 + $0x78] sm:$0xff]
  %v68 = vld [vmem:[%s1 + $0x80] sm:$0xff]
  %v69 = vld [vmem:[%s1 + $0x88] sm:$0xff]
  %v70 = vld [vmem:[%s1 + $0x90] sm:$0xff]
  %v71 = vld [vmem:[%s1 + $0x98] sm:$0xff]
  %v72 = vld [vmem:[%s1 + $0xa0] sm:$0xff]
  %v73 = vld [vmem:[%s1 + $0xa8] sm:$0xff]
  %v74 = vld [vmem:[%s1 + $0xb0] sm:$0xff]
  %v75 = vld [vmem:[%s1 + $0xb8] sm:$0xff]
  %v76 = vld [vmem:[%s1 + $0xc0] sm:$0xff]
  %v77 = vld [vmem:[%s1 + $0xc8] sm:$0xff]
  %v78 = vld [vmem:[%s1 + $0xd0] sm:$0xff]
  %v79 = vld [vmem:[%s1 + $0xd8] sm:$0xff]
  %v80 = vld [vmem:[%s1 + $0xe0] sm:$0xff]
  %v81 = vld [vmem:[%s1 + $0xe8] sm:$0xff]
  %v82 = vld [vmem:[%s1 + $0xf0] sm:$0xff]
  %v83 = vld [vmem:[%s1 + $0xf8] sm:$0xff]
  %v84 = vld [vmem:[%s1 + $0x100] sm:$0xff]
  %v85 = vld [vmem:[%s1 + $0x108] sm:$0xff]
  %v86 = vld [vmem:[%s1 + $0x110] sm:$0xff]
  %v87 = vld [vmem:[%s1 + $0x118] sm:$0xff]
  %v88 = vld [vmem:[%s1 + $0x120] sm:$0xff]
  %v89 = vld [vmem:[%s1 + $0x128] sm:$0xff]
  %v90 = vld [vmem:[%s1 + $0x130] sm:$0xff]
  %v91 = vld [vmem:[%s1 + $0x138] sm:$0xff]
  %v92 = vld [vmem:[%s1 + $0x140] sm:$0xff]
  %v93 = vld [vmem:[%s1 + $0x148] sm:$0xff]
  %v94 = vld [vmem:[%s1 + $0x150] sm:$0xff]
  %v95 = vld [vmem:[%s1 + $0x158] sm:$0xff]
  %v96 = vld [vmem:[%s1 + $0x160] sm:$0xff]
  %v97 = vld [vmem:[%s1 + $0x168] sm:$0xff]
  %v98 = vld [vmem:[%s1 + $0x170] sm:$0xff]
  %v99 = vld [vmem:[%s1 + $0x178] sm:$0xff]
  %v100 = vld [vmem:[%s1 + $0x180] sm:$0xff]
  %v101 = vld [vmem:[%s1 + $0x188] sm:$0xff]
  %v102 = vld [vmem:[%s1 + $0x190] sm:$0xff]
  %v103 = vld [vmem:[%s1 + $0x198] sm:$0xff]
  %v104 = vld [vmem:[%s1 + $0x1a0] sm:$0xff]
  %v105 = vld [vmem:[%s1 + $0x1a8] sm:$0xff]
  %v106 = vld [vmem:[%s1 + $0x1b0] sm:$0xff]
  %v107 = vld [vmem:[%s1 + $0x1b8] sm:$0xff]
  %v108 = vld [vmem:[%s1 + $0x1c0] sm:$0xff]
  %v109 = vld [vmem:[%s1 + $0x1c8] sm:$0xff]
  %v110 = vld [vmem:[%s1 + $0x1d0] sm:$0xff]
  %v111 = vld [vmem:[%s1 + $0x1d8] sm:$0xff]
  %v112 = vld [vmem:[%s1 + $0x1e0] sm:$0xff]
  %v113 = vld [vmem:[%s1 + $0x1e8] sm:$0xff]
  %v114 = vld [vmem:[%s1 + $0x1f0] sm:$0xff]
  %v115 = vld [vmem:[%s1 + $0x1f8] sm:$0xff]
  %v116 = vld [vmem:[%s1 + $0x200] sm:$0xff]
  %v117 = vld [vmem:[%s1 + $0x208] sm:$0xff]
  %v118 = vld [vmem:[%s1 + $0x210] sm:$0xff]
  %v119 = vld [vmem:[%s1 + $0x218] sm:$0xff]
  %v120 = vld [vmem:[%s1 + $0x220] sm:$0xff]
  %v121 = vld [vmem:[%s1 + $0x228] sm:$0xff]
  %v122 = vld [vmem:[%s1 + $0x230] sm:$0xff]
  %v123 = vld [vmem:[%s1 + $0x238] sm:$0xff]
  %v124 = vld [vmem:[%s1 + $0x240] sm:$0xff]
  %v125 = vld [vmem:[%s1 + $0x248] sm:$0xff]
  %v126 = vld [vmem:[%s1 + $0x250] sm:$0xff]
  %v127 = vld [vmem:[%s1 + $0x258] sm:$0xff]
  %v128 = vld [vmem:[%s1 + $0x260] sm:$0xff]
  %v129 = vld [vmem:[%s1 + $0x268] sm:$0xff]
  %v130 = vld [vmem:[%s1 + $0x270] sm:$0xff]
  %v131 = vld [vmem:[%s1 + $0x278] sm:$0xff]
  %v132 = vld [vmem:[%s1 + $0x280] sm:$0xff]
  %v133 = vld [vmem:[%s1 + $0x288] sm:$0xff]
  %v134 = vld [vmem:[%s1 + $0x290] sm:$0xff]
  %v135 = vld [vmem:[%s1 + $0x298] sm:$0xff]
  %v136 = vld [vmem:[%s1 + $0x2a0] sm:$0xff]
  %v137 = vld [vmem:[%s1 + $0x2a8] sm:$0xff]
  %v138 = vld [vmem:[%s1 + $0x2b0] sm:$0xff]
  %v139 = vld [vmem:[%s1 + $0x2b8] sm:$0xff]
  %v140 = vld [vmem:[%s1 + $0x2c0] sm:$0xff]
  %v141 = vld [vmem:[%s1 + $0x2c8] sm:$0xff]
  %v142 = vld [vmem:[%s1 + $0x2d0] sm:$0xff]
  %v143 = vld [vmem:[%s1 + $0x2d8] sm:$0xff]
  %v144 = vld [vmem:[%s1 + $0x2e0] sm:$0xff]
  %v145 = vld [vmem:[%s1 + $0x2e8] sm:$0xff]
  %v146 = vld [vmem:[%s1 + $0x2f0] sm:$0xff]
  %v147 = vld [vmem:[%s1 + $0x2f8] sm:$0xff]
  %v148 = vld [vmem:[%s1 + $0x300] sm:$0xff]
  %v149 = vld [vmem:[%s1 + $0x308] sm:$0xff]
  %v150 = vld [vmem:[%s1 + $0x310] sm:$0xff]
  %v151 = vld [vmem:[%s1 + $0x318] sm:$0xff]
  %v152 = vld [vmem:[%s1 + $0x320] sm:$0xff]
  %v153 = vld [vmem:[%s1 + $0x328] sm:$0xff]
  %v154 = vld [vmem:[%s1 + $0x330] sm:$0xff]
  %v155 = vld [vmem:[%s1 + $0x338] sm:$0xff]
  %v156 = vld [vmem:[%s1 + $0x340] sm:$0xff]
  %v157 = vld [vmem:[%s1 + $0x348] sm:$0xff]
  %v158 = vld [vmem:[%s1 + $0x350] sm:$0xff]
  %v159 = vld [vmem:[%s1 + $0x358] sm:$0xff]
  %v160 = vld [vmem:[%s1 + $0x360] sm:$0xff]
  %v161 = vld [vmem:[%s1 + $0x368] sm:$0xff]
  %v162 = vld [vmem:[%s1 + $0x370] sm:$0xff]
  %v163 = vld [vmem:[%s1 + $0x378] sm:$0xff]
  %v164 = vld [vmem:[%s1 + $0x380] sm:$0xff]
  %v165 = vld [vmem:[%s1 + $0x388] sm:$0xff]
  %v166 = vld [vmem:[%s1 + $0x390] sm:$0xff]
  %v167 = vld [vmem:[%s1 + $0x398] sm:$0xff]
  %v168 = vld [vmem:[%s1 + $0x3a0] sm:$0xff]
  %v169 = vld [vmem:[%s1 + $0x3a8] sm:$0xff]
  %v170 = vld [vmem:[%s1 + $0x3b0] sm:$0xff]
  %v171 = vld [vmem:[%s1 + $0x3b8] sm:$0xff]
  %v172 = vld [vmem:[%s1 + $0x3c0] sm:$0xff]
  %v173 = vld [vmem:[%s1 + $0x3c8] sm:$0xff]
  %v174 = vld [vmem:[%s1 + $0x3d0] sm:$0xff]
  %v175 = vld [vmem:[%s1 + $0x3d8] sm:$0xff]
  %v176 = vld [vmem:[%s1 + $0x3e0] sm:$0xff]
  %v177 = vld [vmem:[%s1 + $0x3e8] sm:$0xff]
  %v178 = vld [vmem:[%s1 + $0x3f0] sm:$0xff]
  %v179 = vld [vmem:[%s1 + $0x3f8] sm:$0xff]
  %v180 = vld [vmem:[%s2] sm:$0x1]
  %v182 = vlaneseq
  %v183 = vshrl.u32 %v182, 7
  %v184 = vsub.s32 0, %v183
  %v185 = vrot.slane %v180, %v184
  %187 = vmatprep.subr.mxu0 0.0
  %188 = vmatpush1.msra.mxu0 %v52
  %189 = vmatprep.subr.mxu0 0.0
  %190 = vmatpush1.msra.mxu0 %v53
  %191 = vmatprep.subr.mxu0 0.0
  %192 = vmatpush1.msra.mxu0 %v54
  %193 = vmatprep.subr.mxu0 0.0
  %194 = vmatpush1.msra.mxu0 %v55
  %195 = vmatprep.subr.mxu0 0.0
  %196 = vmatpush1.msra.mxu0 %v56
  %197 = vmatprep.subr.mxu0 0.0
  %198 = vmatpush1.msra.mxu0 %v57
  %199 = vmatprep.subr.mxu0 0.0
  %200 = vmatpush1.msra.mxu0 %v58
  %201 = vmatprep.subr.mxu0 0.0
  %202 = vmatpush1.msra.mxu0 %v59
  %203 = vmatprep.subr.mxu0 0.0
  %204 = vmatpush1.msra.mxu0 %v60
  %205 = vmatprep.subr.mxu0 0.0
  %206 = vmatpush1.msra.mxu0 %v61
  %207 = vmatprep.subr.mxu0 0.0
  %208 = vmatpush1.msra.mxu0 %v62
  %209 = vmatprep.subr.mxu0 0.0
  %210 = vmatpush1.msra.mxu0 %v63
  %211 = vmatprep.subr.mxu0 0.0
  %212 = vmatpush1.msra.mxu0 %v64
  %213 = vmatprep.subr.mxu0 0.0
  %214 = vmatpush1.msra.mxu0 %v65
  %215 = vmatprep.subr.mxu0 0.0
  %216 = vmatpush1.msra.mxu0 %v66
  %217 = vmatprep.subr.mxu0 0.0
  %218 = vmatpush1.msra.mxu0 %v67
  %219 = vmatprep.subr.mxu0 0.0
  %220 = vmatpush1.msra.mxu0 %v68
  %221 = vmatprep.subr.mxu0 0.0
  %222 = vmatpush1.msra.mxu0 %v69
  %223 = vmatprep.subr.mxu0 0.0
  %224 = vmatpush1.msra.mxu0 %v70
  %225 = vmatprep.subr.mxu0 0.0
  %226 = vmatpush1.msra.mxu0 %v71
  %227 = vmatprep.subr.mxu0 0.0
  %228 = vmatpush1.msra.mxu0 %v72
  %229 = vmatprep.subr.mxu0 0.0
  %230 = vmatpush1.msra.mxu0 %v73
  %231 = vmatprep.subr.mxu0 0.0
  %232 = vmatpush1.msra.mxu0 %v74
  %233 = vmatprep.subr.mxu0 0.0
  %234 = vmatpush1.msra.mxu0 %v75
  %235 = vmatprep.subr.mxu0 0.0
  %236 = vmatpush1.msra.mxu0 %v76
  %237 = vmatprep.subr.mxu0 0.0
  %238 = vmatpush1.msra.mxu0 %v77
  %239 = vmatprep.subr.mxu0 0.0
  %240 = vmatpush1.msra.mxu0 %v78
  %241 = vmatprep.subr.mxu0 0.0
  %242 = vmatpush1.msra.mxu0 %v79
  %243 = vmatprep.subr.mxu0 0.0
  %244 = vmatpush1.msra.mxu0 %v80
  %245 = vmatprep.subr.mxu0 0.0
  %246 = vmatpush1.msra.mxu0 %v81
  %247 = vmatprep.subr.mxu0 0.0
  %248 = vmatpush1.msra.mxu0 %v82
  %249 = vmatprep.subr.mxu0 0.0
  %250 = vmatpush1.msra.mxu0 %v83
  %251 = vmatprep.mubr.f32.mxu0 %v21
  %252 = vmatmul.mubr.f32.gmra.mrb[0].mxu0 %v20
  %v253 = vpop.f32.mrb[0].mxu0
  %v254 = vadd.f32 %v185, %v253
  %v255 = vpop.f32.mrb[0].mxu0
  %256 = vmatprep.mubr.f32.mxu0 %v29
  %257 = vmatmul.mubr.f32.gmra.mrb[0].mxu0 %v28
  %v258 = vpop.f32.mrb[0].mxu0
  %v259 = vadd.f32 %v185, %v258
  %v260 = vpop.f32.mrb[0].mxu0
  %261 = vmatprep.mubr.f32.mxu0 %v37
  %262 = vmatmul.mubr.f32.gmra.mrb[0].mxu0 %v36
  %v263 = vpop.f32.mrb[0].mxu0
  %v264 = vadd.f32 %v185, %v263
  %v265 = vpop.f32.mrb[0].mxu0
  %266 = vmatprep.mubr.f32.mxu0 %v45
  %267 = vmatmul.mubr.f32.gmra.mrb[0].mxu0 %v44
  %v268 = vpop.f32.mrb[0].mxu0
  %v269 = vadd.f32 %v185, %v268
  %v270 = vpop.f32.mrb[0].mxu0
  %271 = vdwg.mxu0
  %272 = vmatprep.subr.mxu0 0.0
  %273 = vmatpush1.msra.mxu0 %v84
  %274 = vmatprep.subr.mxu0 0.0
  %275 = vmatpush1.msra.mxu0 %v85
  %276 = vmatprep.subr.mxu0 0.0
  %277 = vmatpush1.msra.mxu0 %v86
  %278 = vmatprep.subr.mxu0 0.0
  %279 = vmatpush1.msra.mxu0 %v87
  %280 = vmatprep.subr.mxu0 0.0
  %281 = vmatpush1.msra.mxu0 %v88
  %282 = vmatprep.subr.mxu0 0.0
  %283 = vmatpush1.msra.mxu0 %v89
  %284 = vmatprep.subr.mxu0 0.0
  %285 = vmatpush1.msra.mxu0 %v90
  %286 = vmatprep.subr.mxu0 0.0
  %287 = vmatpush1.msra.mxu0 %v91
  %288 = vmatprep.subr.mxu0 0.0
  %289 = vmatpush1.msra.mxu0 %v92
  %290 = vmatprep.subr.mxu0 0.0
  %291 = vmatpush1.msra.mxu0 %v93
  %292 = vmatprep.subr.mxu0 0.0
  %293 = vmatpush1.msra.mxu0 %v94
  %294 = vmatprep.subr.mxu0 0.0
  %295 = vmatpush1.msra.mxu0 %v95
  %296 = vmatprep.subr.mxu0 0.0
  %297 = vmatpush1.msra.mxu0 %v96
  %298 = vmatprep.subr.mxu0 0.0
  %299 = vmatpush1.msra.mxu0 %v97
  %300 = vmatprep.subr.mxu0 0.0
  %301 = vmatpush1.msra.mxu0 %v98
  %302 = vmatprep.subr.mxu0 0.0
  %303 = vmatpush1.msra.mxu0 %v99
  %304 = vmatprep.subr.mxu0 0.0
  %305 = vmatpush1.msra.mxu0 %v100
  %306 = vmatprep.subr.mxu0 0.0
  %307 = vmatpush1.msra.mxu0 %v101
  %308 = vmatprep.subr.mxu0 0.0
  %309 = vmatpush1.msra.mxu0 %v102
  %310 = vmatprep.subr.mxu0 0.0
  %311 = vmatpush1.msra.mxu0 %v103
  %312 = vmatprep.subr.mxu0 0.0
  %313 = vmatpush1.msra.mxu0 %v104
  %314 = vmatprep.subr.mxu0 0.0
  %315 = vmatpush1.msra.mxu0 %v105
  %316 = vmatprep.subr.mxu0 0.0
  %317 = vmatpush1.msra.mxu0 %v106
  %318 = vmatprep.subr.mxu0 0.0
  %319 = vmatpush1.msra.mxu0 %v107
  %320 = vmatprep.subr.mxu0 0.0
  %321 = vmatpush1.msra.mxu0 %v108
  %322 = vmatprep.subr.mxu0 0.0
  %323 = vmatpush1.msra.mxu0 %v109
  %324 = vmatprep.subr.mxu0 0.0
  %325 = vmatpush1.msra.mxu0 %v110
  %326 = vmatprep.subr.mxu0 0.0
  %327 = vmatpush1.msra.mxu0 %v111
  %328 = vmatprep.subr.mxu0 0.0
  %329 = vmatpush1.msra.mxu0 %v112
  %330 = vmatprep.subr.mxu0 0.0
  %331 = vmatpush1.msra.mxu0 %v113
  %332 = vmatprep.subr.mxu0 0.0
  %333 = vmatpush1.msra.mxu0 %v114
  %334 = vmatprep.subr.mxu0 0.0
  %335 = vmatpush1.msra.mxu0 %v115
  %336 = vmatprep.mubr.f32.mxu0 %v23
  %337 = vmatmul.mubr.f32.gmra.mrb[0].mxu0 %v22
  %v338 = vpop.f32.mrb[0].mxu0
  %v339 = vadd.f32 %v254, %v338
  %v340 = vpop.f32.mrb[0].mxu0
  %341 = vmatprep.mubr.f32.mxu0 %v31
  %342 = vmatmul.mubr.f32.gmra.mrb[0].mxu0 %v30
  %v343 = vpop.f32.mrb[0].mxu0
  %v344 = vadd.f32 %v259, %v343
  %v345 = vpop.f32.mrb[0].mxu0
  %346 = vmatprep.mubr.f32.mxu0 %v39
  %347 = vmatmul.mubr.f32.gmra.mrb[0].mxu0 %v38
  %v348 = vpop.f32.mrb[0].mxu0
  %v349 = vadd.f32 %v264, %v348
  %v350 = vpop.f32.mrb[0].mxu0
  %351 = vmatprep.mubr.f32.mxu0 %v47
  %352 = vmatmul.mubr.f32.gmra.mrb[0].mxu0 %v46
  %v353 = vpop.f32.mrb[0].mxu0
  %v354 = vadd.f32 %v269, %v353
  %v355 = vpop.f32.mrb[0].mxu0
  %356 = vdwg.mxu0
  %357 = vmatprep.subr.mxu0 0.0
  %358 = vmatpush1.msra.mxu0 %v116
  %359 = vmatprep.subr.mxu0 0.0
  %360 = vmatpush1.msra.mxu0 %v117
  %361 = vmatprep.subr.mxu0 0.0
  %362 = vmatpush1.msra.mxu0 %v118
  %363 = vmatprep.subr.mxu0 0.0
  %364 = vmatpush1.msra.mxu0 %v119
  %365 = vmatprep.subr.mxu0 0.0
  %366 = vmatpush1.msra.mxu0 %v120
  %367 = vmatprep.subr.mxu0 0.0
  %368 = vmatpush1.msra.mxu0 %v121
  %369 = vmatprep.subr.mxu0 0.0
  %370 = vmatpush1.msra.mxu0 %v122
  %371 = vmatprep.subr.mxu0 0.0
  %372 = vmatpush1.msra.mxu0 %v123
  %373 = vmatprep.subr.mxu0 0.0
  %374 = vmatpush1.msra.mxu0 %v124
  %375 = vmatprep.subr.mxu0 0.0
  %376 = vmatpush1.msra.mxu0 %v125
  %377 = vmatprep.subr.mxu0 0.0
  %378 = vmatpush1.msra.mxu0 %v126
  %379 = vmatprep.subr.mxu0 0.0
  %380 = vmatpush1.msra.mxu0 %v127
  %381 = vmatprep.subr.mxu0 0.0
  %382 = vmatpush1.msra.mxu0 %v128
  %383 = vmatprep.subr.mxu0 0.0
  %384 = vmatpush1.msra.mxu0 %v129
  %385 = vmatprep.subr.mxu0 0.0
  %386 = vmatpush1.msra.mxu0 %v130
  %387 = vmatprep.subr.mxu0 0.0
  %388 = vmatpush1.msra.mxu0 %v131
  %389 = vmatprep.subr.mxu0 0.0
  %390 = vmatpush1.msra.mxu0 %v132
  %391 = vmatprep.subr.mxu0 0.0
  %392 = vmatpush1.msra.mxu0 %v133
  %393 = vmatprep.subr.mxu0 0.0
  %394 = vmatpush1.msra.mxu0 %v134
  %395 = vmatprep.subr.mxu0 0.0
  %396 = vmatpush1.msra.mxu0 %v135
  %397 = vmatprep.subr.mxu0 0.0
  %398 = vmatpush1.msra.mxu0 %v136
  %399 = vmatprep.subr.mxu0 0.0
  %400 = vmatpush1.msra.mxu0 %v137
  %401 = vmatprep.subr.mxu0 0.0
  %402 = vmatpush1.msra.mxu0 %v138
  %403 = vmatprep.subr.mxu0 0.0
  %404 = vmatpush1.msra.mxu0 %v139
  %405 = vmatprep.subr.mxu0 0.0
  %406 = vmatpush1.msra.mxu0 %v140
  %407 = vmatprep.subr.mxu0 0.0
  %408 = vmatpush1.msra.mxu0 %v141
  %409 = vmatprep.subr.mxu0 0.0
  %410 = vmatpush1.msra.mxu0 %v142
  %411 = vmatprep.subr.mxu0 0.0
  %412 = vmatpush1.msra.mxu0 %v143
  %413 = vmatprep.subr.mxu0 0.0
  %414 = vmatpush1.msra.mxu0 %v144
  %415 = vmatprep.subr.mxu0 0.0
  %416 = vmatpush1.msra.mxu0 %v145
  %417 = vmatprep.subr.mxu0 0.0
  %418 = vmatpush1.msra.mxu0 %v146
  %419 = vmatprep.subr.mxu0 0.0
  %420 = vmatpush1.msra.mxu0 %v147
  %421 = vmatprep.mubr.f32.mxu0 %v25
  %422 = vmatmul.mubr.f32.gmra.mrb[0].mxu0 %v24
  %v423 = vpop.f32.mrb[0].mxu0
  %v424 = vadd.f32 %v339, %v423
  %v425 = vpop.f32.mrb[0].mxu0
  %426 = vmatprep.mubr.f32.mxu0 %v33
  %427 = vmatmul.mubr.f32.gmra.mrb[0].mxu0 %v32
  %v428 = vpop.f32.mrb[0].mxu0
  %v429 = vadd.f32 %v344, %v428
  %v430 = vpop.f32.mrb[0].mxu0
  %431 = vmatprep.mubr.f32.mxu0 %v41
  %432 = vmatmul.mubr.f32.gmra.mrb[0].mxu0 %v40
  %v433 = vpop.f32.mrb[0].mxu0
  %v434 = vadd.f32 %v349, %v433
  %v435 = vpop.f32.mrb[0].mxu0
  %436 = vmatprep.mubr.f32.mxu0 %v49
  %437 = vmatmul.mubr.f32.gmra.mrb[0].mxu0 %v48
  %v438 = vpop.f32.mrb[0].mxu0
  %v439 = vadd.f32 %v354, %v438
  %v440 = vpop.f32.mrb[0].mxu0
  %441 = vdwg.mxu0
  %442 = vmatprep.subr.mxu0 0.0
  %443 = vmatpush1.msra.mxu0 %v148
  %444 = vmatprep.subr.mxu0 0.0
  %445 = vmatpush1.msra.mxu0 %v149
  %446 = vmatprep.subr.mxu0 0.0
  %447 = vmatpush1.msra.mxu0 %v150
  %448 = vmatprep.subr.mxu0 0.0
  %449 = vmatpush1.msra.mxu0 %v151
  %450 = vmatprep.subr.mxu0 0.0
  %451 = vmatpush1.msra.mxu0 %v152
  %452 = vmatprep.subr.mxu0 0.0
  %453 = vmatpush1.msra.mxu0 %v153
  %454 = vmatprep.subr.mxu0 0.0
  %455 = vmatpush1.msra.mxu0 %v154
  %456 = vmatprep.subr.mxu0 0.0
  %457 = vmatpush1.msra.mxu0 %v155
  %458 = vmatprep.subr.mxu0 0.0
  %459 = vmatpush1.msra.mxu0 %v156
  %460 = vmatprep.subr.mxu0 0.0
  %461 = vmatpush1.msra.mxu0 %v157
  %462 = vmatprep.subr.mxu0 0.0
  %463 = vmatpush1.msra.mxu0 %v158
  %464 = vmatprep.subr.mxu0 0.0
  %465 = vmatpush1.msra.mxu0 %v159
  %466 = vmatprep.subr.mxu0 0.0
  %467 = vmatpush1.msra.mxu0 %v160
  %468 = vmatprep.subr.mxu0 0.0
  %469 = vmatpush1.msra.mxu0 %v161
  %470 = vmatprep.subr.mxu0 0.0
  %471 = vmatpush1.msra.mxu0 %v162
  %472 = vmatprep.subr.mxu0 0.0
  %473 = vmatpush1.msra.mxu0 %v163
  %474 = vmatprep.subr.mxu0 0.0
  %475 = vmatpush1.msra.mxu0 %v164
  %476 = vmatprep.subr.mxu0 0.0
  %477 = vmatpush1.msra.mxu0 %v165
  %478 = vmatprep.subr.mxu0 0.0
  %479 = vmatpush1.msra.mxu0 %v166
  %480 = vmatprep.subr.mxu0 0.0
  %481 = vmatpush1.msra.mxu0 %v167
  %482 = vmatprep.subr.mxu0 0.0
  %483 = vmatpush1.msra.mxu0 %v168
  %484 = vmatprep.subr.mxu0 0.0
  %485 = vmatpush1.msra.mxu0 %v169
  %486 = vmatprep.subr.mxu0 0.0
  %487 = vmatpush1.msra.mxu0 %v170
  %488 = vmatprep.subr.mxu0 0.0
  %489 = vmatpush1.msra.mxu0 %v171
  %490 = vmatprep.subr.mxu0 0.0
  %491 = vmatpush1.msra.mxu0 %v172
  %492 = vmatprep.subr.mxu0 0.0
  %493 = vmatpush1.msra.mxu0 %v173
  %494 = vmatprep.subr.mxu0 0.0
  %495 = vmatpush1.msra.mxu0 %v174
  %496 = vmatprep.subr.mxu0 0.0
  %497 = vmatpush1.msra.mxu0 %v175
  %498 = vmatprep.subr.mxu0 0.0
  %499 = vmatpush1.msra.mxu0 %v176
  %500 = vmatprep.subr.mxu0 0.0
  %501 = vmatpush1.msra.mxu0 %v177
  %502 = vmatprep.subr.mxu0 0.0
  %503 = vmatpush1.msra.mxu0 %v178
  %504 = vmatprep.subr.mxu0 0.0
  %505 = vmatpush1.msra.mxu0 %v179
  %506 = vmatprep.mubr.f32.mxu0 %v27
  %507 = vmatmul.mubr.f32.gmra.mrb[0].mxu0 %v26
  %v508 = vpop.f32.mrb[0].mxu0
  %v509 = vadd.f32 %v424, %v508
  %v510 = vpop.f32.mrb[0].mxu0
  %511 = vmatprep.mubr.f32.mxu0 %v35
  %512 = vmatmul.mubr.f32.gmra.mrb[0].mxu0 %v34
  %v513 = vpop.f32.mrb[0].mxu0
  %v514 = vadd.f32 %v429, %v513
  %v515 = vpop.f32.mrb[0].mxu0
  %516 = vmatprep.mubr.f32.mxu0 %v43
  %517 = vmatmul.mubr.f32.gmra.mrb[0].mxu0 %v42
  %v518 = vpop.f32.mrb[0].mxu0
  %v519 = vadd.f32 %v434, %v518
  %v520 = vpop.f32.mrb[0].mxu0
  %521 = vmatprep.mubr.f32.mxu0 %v51
  %522 = vmatmul.mubr.f32.gmra.mrb[0].mxu0 %v50
  %v523 = vpop.f32.mrb[0].mxu0
  %v524 = vadd.f32 %v439, %v523
  %v525 = vpop.f32.mrb[0].mxu0
  %526 = vdwg.mxu0
  %vm527 = vcmask 130048
  %v528 = vsel %vm527, %v509, -inf
  %529 = vmax.xlane.f32.xlu0 %v528
  %v530 = vpop.xlane.xlu0 %529
  %v531 = vsel %vm527, %v514, -inf
  %532 = vmax.xlane.f32.xlu0 %v531
  %v533 = vpop.xlane.xlu0 %532
  %v534 = vsel %vm527, %v519, -inf
  %535 = vmax.xlane.f32.xlu0 %v534
  %v536 = vpop.xlane.xlu0 %535
  %v537 = vsel %vm527, %v524, -inf
  %538 = vmax.xlane.f32.xlu0 %v537
  %v539 = vpop.xlane.xlu0 %538
  %v540 = vsub.f32 %v509, %v530
  %v541 = vsub.f32 %v514, %v533
  %v542 = vsub.f32 %v519, %v536
  %v543 = vsub.f32 %v524, %v539
  %v544 = vmul.f32 %v540, 1.442695
  %v545 = vpow.pop %v544
  %v546 = vmul.f32 %v541, 1.442695
  %v547 = vpow.pop %v546
  %v548 = vmul.f32 %v542, 1.442695
  %v549 = vpow.pop %v548
  %v550 = vmul.f32 %v543, 1.442695
  %v551 = vpow.pop %v550
  %v552 = vsel %vm527, %v545, 0.0
  %553 = vadd.xlane.f32.xlu0 %v552
  %v554 = vpop.xlane.xlu0 %553
  %v555 = vsel %vm527, %v547, 0.0
  %556 = vadd.xlane.f32.xlu0 %v555
  %v557 = vpop.xlane.xlu0 %556
  %v558 = vsel %vm527, %v549, 0.0
  %559 = vadd.xlane.f32.xlu0 %v558
  %v560 = vpop.xlane.xlu0 %559
  %v561 = vsel %vm527, %v551, 0.0
  %562 = vadd.xlane.f32.xlu0 %v561
  %v563 = vpop.xlane.xlu0 %562
  %v564 = vrcp.pop %v554
  %v565 = vrcp.pop %v557
  %v566 = vrcp.pop %v560
  %v567 = vrcp.pop %v563
  %v568 = vmul.f32 %v545, %v564
  %v569 = vmul.f32 %v547, %v565
  %v570 = vmul.f32 %v549, %v566
  %v571 = vmul.f32 %v551, %v567
  %v572 = vld [vmem:[%s3] sm:$0xff]
  %v573 = vld [vmem:[%s3 + $0x8] sm:$0xff]
  %v574 = vld [vmem:[%s3 + $0x10] sm:$0xff]
  %v575 = vld [vmem:[%s3 + $0x18] sm:$0xff]
  %v576 = vld [vmem:[%s3 + $0x20] sm:$0xff]
  %v577 = vld [vmem:[%s3 + $0x28] sm:$0xff]
  %v578 = vld [vmem:[%s3 + $0x30] sm:$0xff]
  %v579 = vld [vmem:[%s3 + $0x38] sm:$0xff]
  %v580 = vld [vmem:[%s3 + $0x40] sm:$0xff]
  %v581 = vld [vmem:[%s3 + $0x48] sm:$0xff]
  %v582 = vld [vmem:[%s3 + $0x50] sm:$0xff]
  %v583 = vld [vmem:[%s3 + $0x58] sm:$0xff]
  %v584 = vld [vmem:[%s3 + $0x60] sm:$0xff]
  %v585 = vld [vmem:[%s3 + $0x68] sm:$0xff]
  %v586 = vld [vmem:[%s3 + $0x70] sm:$0xff]
  %v587 = vld [vmem:[%s3 + $0x78] sm:$0xff]
  %v588 = vld [vmem:[%s4] sm:$0xff]
  %v590 = vlaneseq
  %v591 = vshrl.u32 %v590, 7
  %v592 = vsub.s32 0, %v591
  %v593 = vrot.slane %v588, %v592
  %v594 = vlaneseq
  %v595 = vshrl.u32 %v594, 7
  %v596 = vsub.s32 1, %v595
  %v597 = vrot.slane %v588, %v596
  %v598 = vlaneseq
  %v599 = vshrl.u32 %v598, 7
  %v600 = vsub.s32 2, %v599
  %v601 = vrot.slane %v588, %v600
  %v602 = vlaneseq
  %v603 = vshrl.u32 %v602, 7
  %v604 = vsub.s32 3, %v603
  %v605 = vrot.slane %v588, %v604
  %v606 = vlaneseq
  %v607 = vshrl.u32 %v606, 7
  %v608 = vsub.s32 4, %v607
  %v609 = vrot.slane %v588, %v608
  %v610 = vlaneseq
  %v611 = vshrl.u32 %v610, 7
  %v612 = vsub.s32 5, %v611
  %v613 = vrot.slane %v588, %v612
  %v614 = vlaneseq
  %v615 = vshrl.u32 %v614, 7
  %v616 = vsub.s32 6, %v615
  %v617 = vrot.slane %v588, %v616
  %v618 = vlaneseq
  %v619 = vshrl.u32 %v618, 7
  %v620 = vsub.s32 7, %v619
  %v621 = vrot.slane %v588, %v620
  %v631 = vsel %vm527, %v568, 0
  %v634 = vsel %vm527, %v569, 0
  %v637 = vsel %vm527, %v570, 0
  %v640 = vsel %vm527, %v571, 0
  %642 = vmatprep.subr.mxu0 %v573
  %643 = vmatpush1.msra.mxu0 %v572
  %644 = vmatprep.subr.mxu0 %v581
  %645 = vmatpush1.msra.mxu0 %v580
  %646 = vmatprep.subr.mxu0 0.0
  %647 = vmatpush1.msra.mxu0 0.0
  %648 = vmatprep.subr.mxu0 0.0
  %649 = vmatpush1.msra.mxu0 0.0
  %650 = vmatprep.subr.mxu0 0.0
  %651 = vmatpush1.msra.mxu0 0.0
  %652 = vmatprep.subr.mxu0 0.0
  %653 = vmatpush1.msra.mxu0 0.0
  %654 = vmatprep.subr.mxu0 0.0
  %655 = vmatpush1.msra.mxu0 0.0
  %656 = vmatprep.subr.mxu0 0.0
  %657 = vmatpush1.msra.mxu0 0.0
  %658 = vmatprep.subr.mxu0 0.0
  %659 = vmatpush1.msra.mxu0 0.0
  %660 = vmatprep.subr.mxu0 0.0
  %661 = vmatpush1.msra.mxu0 0.0
  %662 = vmatprep.subr.mxu0 0.0
  %663 = vmatpush1.msra.mxu0 0.0
  %664 = vmatprep.subr.mxu0 0.0
  %665 = vmatpush1.msra.mxu0 0.0
  %666 = vmatprep.subr.mxu0 0.0
  %667 = vmatpush1.msra.mxu0 0.0
  %668 = vmatprep.subr.mxu0 0.0
  %669 = vmatpush1.msra.mxu0 0.0
  %670 = vmatprep.subr.mxu0 0.0
  %671 = vmatpush1.msra.mxu0 0.0
  %672 = vmatprep.subr.mxu0 0.0
  %673 = vmatpush1.msra.mxu0 0.0
  %674 = vmatprep.subr.mxu0 0.0
  %675 = vmatpush1.msra.mxu0 0.0
  %676 = vmatprep.subr.mxu0 0.0
  %677 = vmatpush1.msra.mxu0 0.0
  %678 = vmatprep.subr.mxu0 0.0
  %679 = vmatpush1.msra.mxu0 0.0
  %680 = vmatprep.subr.mxu0 0.0
  %681 = vmatpush1.msra.mxu0 0.0
  %682 = vmatprep.subr.mxu0 0.0
  %683 = vmatpush1.msra.mxu0 0.0
  %684 = vmatprep.subr.mxu0 0.0
  %685 = vmatpush1.msra.mxu0 0.0
  %686 = vmatprep.subr.mxu0 0.0
  %687 = vmatpush1.msra.mxu0 0.0
  %688 = vmatprep.subr.mxu0 0.0
  %689 = vmatpush1.msra.mxu0 0.0
  %690 = vmatprep.subr.mxu0 0.0
  %691 = vmatpush1.msra.mxu0 0.0
  %692 = vmatprep.subr.mxu0 0.0
  %693 = vmatpush1.msra.mxu0 0.0
  %694 = vmatprep.subr.mxu0 0.0
  %695 = vmatpush1.msra.mxu0 0.0
  %696 = vmatprep.subr.mxu0 0.0
  %697 = vmatpush1.msra.mxu0 0.0
  %698 = vmatprep.subr.mxu0 0.0
  %699 = vmatpush1.msra.mxu0 0.0
  %700 = vmatprep.subr.mxu0 0.0
  %701 = vmatpush1.msra.mxu0 0.0
  %702 = vmatprep.subr.mxu0 0.0
  %703 = vmatpush1.msra.mxu0 0.0
  %704 = vmatprep.subr.mxu0 0.0
  %705 = vmatpush1.msra.mxu0 0.0
  %706 = vmatprep.mubr.f32.mxu0 0.0
  %707 = vmatmul.mubr.f32.gmra.mrb[0].mxu0 %v631
  %v708 = vpop.f32.mrb[0].mxu0
  %v709 = vadd.f32 %v593, %v708
  %v710 = vpop.f32.mrb[0].mxu0
  %v711 = vadd.f32 %v597, %v710
  %712 = vmatprep.mubr.f32.mxu0 0.0
  %713 = vmatmul.mubr.f32.gmra.mrb[0].mxu0 %v634
  %v714 = vpop.f32.mrb[0].mxu0
  %v715 = vadd.f32 %v593, %v714
  %v716 = vpop.f32.mrb[0].mxu0
  %v717 = vadd.f32 %v597, %v716
  %718 = vmatprep.mubr.f32.mxu0 0.0
  %719 = vmatmul.mubr.f32.gmra.mrb[0].mxu0 %v637
  %v720 = vpop.f32.mrb[0].mxu0
  %v721 = vadd.f32 %v593, %v720
  %v722 = vpop.f32.mrb[0].mxu0
  %v723 = vadd.f32 %v597, %v722
  %724 = vmatprep.mubr.f32.mxu0 0.0
  %725 = vmatmul.mubr.f32.gmra.mrb[0].mxu0 %v640
  %v726 = vpop.f32.mrb[0].mxu0
  %v727 = vadd.f32 %v593, %v726
  %v728 = vpop.f32.mrb[0].mxu0
  %v729 = vadd.f32 %v597, %v728
  %730 = vdwg.mxu0
  %731 = vmatprep.subr.mxu0 %v575
  %732 = vmatpush1.msra.mxu0 %v574
  %733 = vmatprep.subr.mxu0 %v583
  %734 = vmatpush1.msra.mxu0 %v582
  %735 = vmatprep.subr.mxu0 0.0
  %736 = vmatpush1.msra.mxu0 0.0
  %737 = vmatprep.subr.mxu0 0.0
  %738 = vmatpush1.msra.mxu0 0.0
  %739 = vmatprep.subr.mxu0 0.0
  %740 = vmatpush1.msra.mxu0 0.0
  %741 = vmatprep.subr.mxu0 0.0
  %742 = vmatpush1.msra.mxu0 0.0
  %743 = vmatprep.subr.mxu0 0.0
  %744 = vmatpush1.msra.mxu0 0.0
  %745 = vmatprep.subr.mxu0 0.0
  %746 = vmatpush1.msra.mxu0 0.0
  %747 = vmatprep.subr.mxu0 0.0
  %748 = vmatpush1.msra.mxu0 0.0
  %749 = vmatprep.subr.mxu0 0.0
  %750 = vmatpush1.msra.mxu0 0.0
  %751 = vmatprep.subr.mxu0 0.0
  %752 = vmatpush1.msra.mxu0 0.0
  %753 = vmatprep.subr.mxu0 0.0
  %754 = vmatpush1.msra.mxu0 0.0
  %755 = vmatprep.subr.mxu0 0.0
  %756 = vmatpush1.msra.mxu0 0.0
  %757 = vmatprep.subr.mxu0 0.0
  %758 = vmatpush1.msra.mxu0 0.0
  %759 = vmatprep.subr.mxu0 0.0
  %760 = vmatpush1.msra.mxu0 0.0
  %761 = vmatprep.subr.mxu0 0.0
  %762 = vmatpush1.msra.mxu0 0.0
  %763 = vmatprep.subr.mxu0 0.0
  %764 = vmatpush1.msra.mxu0 0.0
  %765 = vmatprep.subr.mxu0 0.0
  %766 = vmatpush1.msra.mxu0 0.0
  %767 = vmatprep.subr.mxu0 0.0
  %768 = vmatpush1.msra.mxu0 0.0
  %769 = vmatprep.subr.mxu0 0.0
  %770 = vmatpush1.msra.mxu0 0.0
  %771 = vmatprep.subr.mxu0 0.0
  %772 = vmatpush1.msra.mxu0 0.0
  %773 = vmatprep.subr.mxu0 0.0
  %774 = vmatpush1.msra.mxu0 0.0
  %775 = vmatprep.subr.mxu0 0.0
  %776 = vmatpush1.msra.mxu0 0.0
  %777 = vmatprep.subr.mxu0 0.0
  %778 = vmatpush1.msra.mxu0 0.0
  %779 = vmatprep.subr.mxu0 0.0
  %780 = vmatpush1.msra.mxu0 0.0
  %781 = vmatprep.subr.mxu0 0.0
  %782 = vmatpush1.msra.mxu0 0.0
  %783 = vmatprep.subr.mxu0 0.0
  %784 = vmatpush1.msra.mxu0 0.0
  %785 = vmatprep.subr.mxu0 0.0
  %786 = vmatpush1.msra.mxu0 0.0
  %787 = vmatprep.subr.mxu0 0.0
  %788 = vmatpush1.msra.mxu0 0.0
  %789 = vmatprep.subr.mxu0 0.0
  %790 = vmatpush1.msra.mxu0 0.0
  %791 = vmatprep.subr.mxu0 0.0
  %792 = vmatpush1.msra.mxu0 0.0
  %793 = vmatprep.subr.mxu0 0.0
  %794 = vmatpush1.msra.mxu0 0.0
  %795 = vmatprep.mubr.f32.mxu0 0.0
  %796 = vmatmul.mubr.f32.gmra.mrb[0].mxu0 %v631
  %v797 = vpop.f32.mrb[0].mxu0
  %v798 = vadd.f32 %v601, %v797
  %v799 = vpop.f32.mrb[0].mxu0
  %v800 = vadd.f32 %v605, %v799
  %801 = vmatprep.mubr.f32.mxu0 0.0
  %802 = vmatmul.mubr.f32.gmra.mrb[0].mxu0 %v634
  %v803 = vpop.f32.mrb[0].mxu0
  %v804 = vadd.f32 %v601, %v803
  %v805 = vpop.f32.mrb[0].mxu0
  %v806 = vadd.f32 %v605, %v805
  %807 = vmatprep.mubr.f32.mxu0 0.0
  %808 = vmatmul.mubr.f32.gmra.mrb[0].mxu0 %v637
  %v809 = vpop.f32.mrb[0].mxu0
  %v810 = vadd.f32 %v601, %v809
  %v811 = vpop.f32.mrb[0].mxu0
  %v812 = vadd.f32 %v605, %v811
  %813 = vmatprep.mubr.f32.mxu0 0.0
  %814 = vmatmul.mubr.f32.gmra.mrb[0].mxu0 %v640
  %v815 = vpop.f32.mrb[0].mxu0
  %v816 = vadd.f32 %v601, %v815
  %v817 = vpop.f32.mrb[0].mxu0
  %v818 = vadd.f32 %v605, %v817
  %819 = vdwg.mxu0
  %820 = vmatprep.subr.mxu0 %v577
  %821 = vmatpush1.msra.mxu0 %v576
  %822 = vmatprep.subr.mxu0 %v585
  %823 = vmatpush1.msra.mxu0 %v584
  %824 = vmatprep.subr.mxu0 0.0
  %825 = vmatpush1.msra.mxu0 0.0
  %826 = vmatprep.subr.mxu0 0.0
  %827 = vmatpush1.msra.mxu0 0.0
  %828 = vmatprep.subr.mxu0 0.0
  %829 = vmatpush1.msra.mxu0 0.0
  %830 = vmatprep.subr.mxu0 0.0
  %831 = vmatpush1.msra.mxu0 0.0
  %832 = vmatprep.subr.mxu0 0.0
  %833 = vmatpush1.msra.mxu0 0.0
  %834 = vmatprep.subr.mxu0 0.0
  %835 = vmatpush1.msra.mxu0 0.0
  %836 = vmatprep.subr.mxu0 0.0
  %837 = vmatpush1.msra.mxu0 0.0
  %838 = vmatprep.subr.mxu0 0.0
  %839 = vmatpush1.msra.mxu0 0.0
  %840 = vmatprep.subr.mxu0 0.0
  %841 = vmatpush1.msra.mxu0 0.0
  %842 = vmatprep.subr.mxu0 0.0
  %843 = vmatpush1.msra.mxu0 0.0
  %844 = vmatprep.subr.mxu0 0.0
  %845 = vmatpush1.msra.mxu0 0.0
  %846 = vmatprep.subr.mxu0 0.0
  %847 = vmatpush1.msra.mxu0 0.0
  %848 = vmatprep.subr.mxu0 0.0
  %849 = vmatpush1.msra.mxu0 0.0
  %850 = vmatprep.subr.mxu0 0.0
  %851 = vmatpush1.msra.mxu0 0.0
  %852 = vmatprep.subr.mxu0 0.0
  %853 = vmatpush1.msra.mxu0 0.0
  %854 = vmatprep.subr.mxu0 0.0
  %855 = vmatpush1.msra.mxu0 0.0
  %856 = vmatprep.subr.mxu0 0.0
  %857 = vmatpush1.msra.mxu0 0.0
  %858 = vmatprep.subr.mxu0 0.0
  %859 = vmatpush1.msra.mxu0 0.0
  %860 = vmatprep.subr.mxu0 0.0
  %861 = vmatpush1.msra.mxu0 0.0
  %862 = vmatprep.subr.mxu0 0.0
  %863 = vmatpush1.msra.mxu0 0.0
  %864 = vmatprep.subr.mxu0 0.0
  %865 = vmatpush1.msra.mxu0 0.0
  %866 = vmatprep.subr.mxu0 0.0
  %867 = vmatpush1.msra.mxu0 0.0
  %868 = vmatprep.subr.mxu0 0.0
  %869 = vmatpush1.msra.mxu0 0.0
  %870 = vmatprep.subr.mxu0 0.0
  %871 = vmatpush1.msra.mxu0 0.0
  %872 = vmatprep.subr.mxu0 0.0
  %873 = vmatpush1.msra.mxu0 0.0
  %874 = vmatprep.subr.mxu0 0.0
  %875 = vmatpush1.msra.mxu0 0.0
  %876 = vmatprep.subr.mxu0 0.0
  %877 = vmatpush1.msra.mxu0 0.0
  %878 = vmatprep.subr.mxu0 0.0
  %879 = vmatpush1.msra.mxu0 0.0
  %880 = vmatprep.subr.mxu0 0.0
  %881 = vmatpush1.msra.mxu0 0.0
  %882 = vmatprep.subr.mxu0 0.0
  %883 = vmatpush1.msra.mxu0 0.0
  %884 = vmatprep.mubr.f32.mxu0 0.0
  %885 = vmatmul.mubr.f32.gmra.mrb[0].mxu0 %v631
  %v886 = vpop.f32.mrb[0].mxu0
  %v887 = vadd.f32 %v609, %v886
  %v888 = vpop.f32.mrb[0].mxu0
  %v889 = vadd.f32 %v613, %v888
  %890 = vmatprep.mubr.f32.mxu0 0.0
  %891 = vmatmul.mubr.f32.gmra.mrb[0].mxu0 %v634
  %v892 = vpop.f32.mrb[0].mxu0
  %v893 = vadd.f32 %v609, %v892
  %v894 = vpop.f32.mrb[0].mxu0
  %v895 = vadd.f32 %v613, %v894
  %896 = vmatprep.mubr.f32.mxu0 0.0
  %897 = vmatmul.mubr.f32.gmra.mrb[0].mxu0 %v637
  %v898 = vpop.f32.mrb[0].mxu0
  %v899 = vadd.f32 %v609, %v898
  %v900 = vpop.f32.mrb[0].mxu0
  %v901 = vadd.f32 %v613, %v900
  %902 = vmatprep.mubr.f32.mxu0 0.0
  %903 = vmatmul.mubr.f32.gmra.mrb[0].mxu0 %v640
  %v904 = vpop.f32.mrb[0].mxu0
  %v905 = vadd.f32 %v609, %v904
  %v906 = vpop.f32.mrb[0].mxu0
  %v907 = vadd.f32 %v613, %v906
  %908 = vdwg.mxu0
  %909 = vmatprep.subr.mxu0 %v579
  %910 = vmatpush1.msra.mxu0 %v578
  %911 = vmatprep.subr.mxu0 %v587
  %912 = vmatpush1.msra.mxu0 %v586
  %913 = vmatprep.subr.mxu0 0.0
  %914 = vmatpush1.msra.mxu0 0.0
  %915 = vmatprep.subr.mxu0 0.0
  %916 = vmatpush1.msra.mxu0 0.0
  %917 = vmatprep.subr.mxu0 0.0
  %918 = vmatpush1.msra.mxu0 0.0
  %919 = vmatprep.subr.mxu0 0.0
  %920 = vmatpush1.msra.mxu0 0.0
  %921 = vmatprep.subr.mxu0 0.0
  %922 = vmatpush1.msra.mxu0 0.0
  %923 = vmatprep.subr.mxu0 0.0
  %924 = vmatpush1.msra.mxu0 0.0
  %925 = vmatprep.subr.mxu0 0.0
  %926 = vmatpush1.msra.mxu0 0.0
  %927 = vmatprep.subr.mxu0 0.0
  %928 = vmatpush1.msra.mxu0 0.0
  %929 = vmatprep.subr.mxu0 0.0
  %930 = vmatpush1.msra.mxu0 0.0
  %931 = vmatprep.subr.mxu0 0.0
  %932 = vmatpush1.msra.mxu0 0.0
  %933 = vmatprep.subr.mxu0 0.0
  %934 = vmatpush1.msra.mxu0 0.0
  %935 = vmatprep.subr.mxu0 0.0
  %936 = vmatpush1.msra.mxu0 0.0
  %937 = vmatprep.subr.mxu0 0.0
  %938 = vmatpush1.msra.mxu0 0.0
  %939 = vmatprep.subr.mxu0 0.0
  %940 = vmatpush1.msra.mxu0 0.0
  %941 = vmatprep.subr.mxu0 0.0
  %942 = vmatpush1.msra.mxu0 0.0
  %943 = vmatprep.subr.mxu0 0.0
  %944 = vmatpush1.msra.mxu0 0.0
  %945 = vmatprep.subr.mxu0 0.0
  %946 = vmatpush1.msra.mxu0 0.0
  %947 = vmatprep.subr.mxu0 0.0
  %948 = vmatpush1.msra.mxu0 0.0
  %949 = vmatprep.subr.mxu0 0.0
  %950 = vmatpush1.msra.mxu0 0.0
  %951 = vmatprep.subr.mxu0 0.0
  %952 = vmatpush1.msra.mxu0 0.0
  %953 = vmatprep.subr.mxu0 0.0
  %954 = vmatpush1.msra.mxu0 0.0
  %955 = vmatprep.subr.mxu0 0.0
  %956 = vmatpush1.msra.mxu0 0.0
  %957 = vmatprep.subr.mxu0 0.0
  %958 = vmatpush1.msra.mxu0 0.0
  %959 = vmatprep.subr.mxu0 0.0
  %960 = vmatpush1.msra.mxu0 0.0
  %961 = vmatprep.subr.mxu0 0.0
  %962 = vmatpush1.msra.mxu0 0.0
  %963 = vmatprep.subr.mxu0 0.0
  %964 = vmatpush1.msra.mxu0 0.0
  %965 = vmatprep.subr.mxu0 0.0
  %966 = vmatpush1.msra.mxu0 0.0
  %967 = vmatprep.subr.mxu0 0.0
  %968 = vmatpush1.msra.mxu0 0.0
  %969 = vmatprep.subr.mxu0 0.0
  %970 = vmatpush1.msra.mxu0 0.0
  %971 = vmatprep.subr.mxu0 0.0
  %972 = vmatpush1.msra.mxu0 0.0
  %973 = vmatprep.mubr.f32.mxu0 0.0
  %974 = vmatmul.mubr.f32.gmra.mrb[0].mxu0 %v631
  %v975 = vpop.f32.mrb[0].mxu0
  %v976 = vadd.f32 %v617, %v975
  %v977 = vpop.f32.mrb[0].mxu0
  %v978 = vadd.f32 %v621, %v977
  %979 = vmatprep.mubr.f32.mxu0 0.0
  %980 = vmatmul.mubr.f32.gmra.mrb[0].mxu0 %v634
  %v981 = vpop.f32.mrb[0].mxu0
  %v982 = vadd.f32 %v617, %v981
  %v983 = vpop.f32.mrb[0].mxu0
  %v984 = vadd.f32 %v621, %v983
  %985 = vmatprep.mubr.f32.mxu0 0.0
  %986 = vmatmul.mubr.f32.gmra.mrb[0].mxu0 %v637
  %v987 = vpop.f32.mrb[0].mxu0
  %v988 = vadd.f32 %v617, %v987
  %v989 = vpop.f32.mrb[0].mxu0
  %v990 = vadd.f32 %v621, %v989
  %991 = vmatprep.mubr.f32.mxu0 0.0
  %992 = vmatmul.mubr.f32.gmra.mrb[0].mxu0 %v640
  %v993 = vpop.f32.mrb[0].mxu0
  %v994 = vadd.f32 %v617, %v993
  %v995 = vpop.f32.mrb[0].mxu0
  %v996 = vadd.f32 %v621, %v995
  %997 = vdwg.mxu0
  %998 = vst [vmem:[%s5] sm:$0xff] %v709
  %999 = vst [vmem:[%s5 + $0x8] sm:$0xff] %v711
  %1000 = vst [vmem:[%s5 + $0x10] sm:$0xff] %v798
  %1001 = vst [vmem:[%s5 + $0x18] sm:$0xff] %v800
  %1002 = vst [vmem:[%s5 + $0x20] sm:$0xff] %v887
  %1003 = vst [vmem:[%s5 + $0x28] sm:$0xff] %v889
  %1004 = vst [vmem:[%s5 + $0x30] sm:$0xff] %v976
  %1005 = vst [vmem:[%s5 + $0x38] sm:$0xff] %v978
  %1006 = vst [vmem:[%s5 + $0x40] sm:$0xff] %v715
  %1007 = vst [vmem:[%s5 + $0x48] sm:$0xff] %v717
  %1008 = vst [vmem:[%s5 + $0x50] sm:$0xff] %v804
  %1009 = vst [vmem:[%s5 + $0x58] sm:$0xff] %v806
  %1010 = vst [vmem:[%s5 + $0x60] sm:$0xff] %v893
  %1011 = vst [vmem:[%s5 + $0x68] sm:$0xff] %v895
  %1012 = vst [vmem:[%s5 + $0x70] sm:$0xff] %v982
  %1013 = vst [vmem:[%s5 + $0x78] sm:$0xff] %v984
  %1014 = vst [vmem:[%s5 + $0x80] sm:$0xff] %v721
  %1015 = vst [vmem:[%s5 + $0x88] sm:$0xff] %v723
  %1016 = vst [vmem:[%s5 + $0x90] sm:$0xff] %v810
  %1017 = vst [vmem:[%s5 + $0x98] sm:$0xff] %v812
  %1018 = vst [vmem:[%s5 + $0xa0] sm:$0xff] %v899
  %1019 = vst [vmem:[%s5 + $0xa8] sm:$0xff] %v901
  %1020 = vst [vmem:[%s5 + $0xb0] sm:$0xff] %v988
  %1021 = vst [vmem:[%s5 + $0xb8] sm:$0xff] %v990
  %1022 = vst [vmem:[%s5 + $0xc0] sm:$0xff] %v727
  %1023 = vst [vmem:[%s5 + $0xc8] sm:$0xff] %v729
  %1024 = vst [vmem:[%s5 + $0xd0] sm:$0xff] %v816
  %1025 = vst [vmem:[%s5 + $0xd8] sm:$0xff] %v818
  %1026 = vst [vmem:[%s5 + $0xe0] sm:$0xff] %v905
  %1027 = vst [vmem:[%s5 + $0xe8] sm:$0xff] %v907
  %1028 = vst [vmem:[%s5 + $0xf0] sm:$0xff] %v994
  %1029 = vst [vmem:[%s5 + $0xf8] sm:$0xff] %v996
  // Predicated region
  $region22: #{forward.1} parent=0 // pred_check
    _
  $region23: #{forward.1} parent=0 // pred_check_branch
    %1031 = sbr.rel (0) target = $region25
  $region24: #{forward.1} parent=0 // pred_region
    _
  $region25: #{forward.1} parent=0 // pred_fallthru
    _
  // Predicated region
  $region26: #{forward.1} parent=0 // pred_check
    _
  $region27: #{forward.1} parent=0 // pred_check_branch
    %1033 = sbr.rel (0) target = $region29
  $region28: #{forward.1} parent=0 // pred_region
    _
  $region29: #{forward.1} parent=0 // pred_fallthru
    _

</llo_original>
